<compile_context>
chip_gen: v7x
topology: tpu7x:2x2x1
jax: 0.10.0
libtpu: 0.0.40
codegen_flags: <defaults>
</compile_context>

<pallas_src>
import jax
import jax.numpy as jnp
from jax import lax
from jax.experimental import pallas as pl
from jax.experimental.pallas import tpu as pltpu


# --------------------------------------------------------------------------- #
# Kernel
# --------------------------------------------------------------------------- #
def _make_decoder_kernel(num_layers: int, hidden_size: int, out_size: int,
                         num_steps: int, compute_dtype):
    L, H, O, T = num_layers, hidden_size, out_size, num_steps

    def kernel(*refs):
        n_in = 3 + 2 * L + 2
        x_ref, h_ref, c_ref = refs[0:3]
        layer_refs = refs[3:3 + 2 * L]          # per layer: stacked W, bias
        wout_ref = refs[3 + 2 * L]
        bout_ref = refs[3 + 2 * L + 1]
        pred_ref, hout_ref, cout_ref = refs[n_in:n_in + 3]
        h_scr, c_scr = refs[n_in + 3:]          # VMEM scratch [L, B, H] each

        # Decoder state lives in VMEM scratch for the whole T-step decode.
        h_scr[...] = h_ref[...]
        c_scr[...] = c_ref[...]

        def one_step(t, inp):
            x = inp                              # [B, O] f32
            for l in range(L):
                w = layer_refs[2 * l][...]       # [in_l + H, 4H], gate order i,f,o,g
                b = layer_refs[2 * l + 1][...]   # [1, 4H]
                h_prev = h_scr[l]                # [B, H]
                c_prev = c_scr[l]                # [B, H]

                # Fused gate matmul: one MXU pass over the stacked weights.
                zx = jnp.concatenate([x, h_prev], axis=-1).astype(compute_dtype)
                gates = jnp.dot(zx, w, preferred_element_type=jnp.float32) + b

                # One sigmoid pass over [B, 3H] (i|f|o), one tanh pass over [B, H] (g).
                sig = jax.nn.sigmoid(gates[:, :3 * H])
                g_g = jnp.tanh(gates[:, 3 * H:])
                i_g = sig[:, 0:H]
                f_g = sig[:, H:2 * H]
                o_g = sig[:, 2 * H:3 * H]

                c_new = f_g * c_prev + i_g * g_g
                h_new = o_g * jnp.tanh(c_new)
                h_scr[l] = h_new
                c_scr[l] = c_new
                x = h_new

            # Lane-dense (padded) output head -> unmasked store.
            pred = (jnp.dot(x.astype(compute_dtype), wout_ref[...],
                            preferred_element_type=jnp.float32) + bout_ref[...])
            pred_ref[t] = pred                    # [B, O_pad]
            return pred[:, :O]                    # autoregressive feedback

        if T == 1:
            one_step(0, x_ref[...])
        else:
            lax.fori_loop(0, T, one_step, x_ref[...], unroll=(T <= 8))

        # Safe with aliasing: h_ref/c_ref were fully read into scratch above.
        hout_ref[...] = h_scr[...]
        cout_ref[...] = c_scr[...]

    return kernel


# --------------------------------------------------------------------------- #
# One-time parameter preparation (hoisted out of the per-step path)
# --------------------------------------------------------------------------- #
def prepare_params(params, *, compute_dtype=jnp.float32):
    """params in PyTorch convention: 'w_emb'[E,O], 'b_emb'[E],
    'layers'=[(wih[4H,in], whh[4H,H], bih[4H], bhh[4H]), ...],
    'w_out'[O,H], 'b_out'[O]."""
    layers = params["layers"]
    H = layers[0][1].shape[1]
    O = params["w_out"].shape[0]
    O_pad = ((O + 127) // 128) * 128

    def permute_ifog(a):  # columns [i,f,g,o] -> [i,f,o,g]
        return jnp.concatenate([a[..., 0:H], a[..., H:2 * H],
                                a[..., 3 * H:4 * H], a[..., 2 * H:3 * H]], axis=-1)

    w_emb = params["w_emb"].astype(jnp.float32)          # [E, O]
    b_emb = params["b_emb"].astype(jnp.float32)          # [E]

    prepped = {"layers": [], "H": H, "O": O, "O_pad": O_pad,
               "num_layers": len(layers), "compute_dtype": compute_dtype}
    for l, (wih, whh, bih, bhh) in enumerate(layers):
        wih = wih.astype(jnp.float32)
        whh = whh.astype(jnp.float32)
        bih = bih.astype(jnp.float32)
        bhh = bhh.astype(jnp.float32)
        if l == 0:
            # Fold embedding Linear into layer 0 (exact: dropout == identity, eval).
            w_in = w_emb.T @ wih.T                        # [O, 4H]
            bias = b_emb @ wih.T + bih + bhh              # [4H]
        else:
            w_in = wih.T                                  # [H, 4H]
            bias = bih + bhh
        w_stack = permute_ifog(jnp.concatenate([w_in, whh.T], axis=0))  # [in_l+H, 4H]
        bias = permute_ifog(bias.reshape(1, 4 * H))
        prepped["layers"].append((w_stack.astype(compute_dtype),
                                  bias.astype(jnp.float32)))

    w_out = params["w_out"].astype(jnp.float32).T          # [H, O]
    b_out = params["b_out"].astype(jnp.float32).reshape(1, O)
    w_out_p = jnp.zeros((H, O_pad), jnp.float32).at[:, :O].set(w_out)
    b_out_p = jnp.zeros((1, O_pad), jnp.float32).at[:, :O].set(b_out)
    prepped["w_out"] = w_out_p.astype(compute_dtype)
    prepped["b_out"] = b_out_p
    return prepped


# --------------------------------------------------------------------------- #
# Wrappers
# --------------------------------------------------------------------------- #
def decoder_decode(x, hidden, cell, prepped, *, num_steps=1):
    """T-step autoregressive decode in one kernel. NOTE: donates hidden/cell
    buffers (input_output_aliases) — do not reuse the passed arrays afterwards."""
    B, O = x.shape
    L, _, H = hidden.shape
    O_pad = prepped["O_pad"]
    compute_dtype = prepped["compute_dtype"]

    inputs = [x.astype(jnp.float32),
              hidden.astype(jnp.float32),
              cell.astype(jnp.float32)]
    for w_stack, bias in prepped["layers"]:
        inputs += [w_stack, bias]
    inputs += [prepped["w_out"], prepped["b_out"]]

    # Cost estimate (helps XLA schedule the tiny custom call).
    flops = sum(2 * B * w.shape[0] * w.shape[1] for w, _ in prepped["layers"])
    flops = num_steps * (flops + 2 * B * H * O_pad)
    transcendentals = num_steps * L * B * 5 * H
    in_bytes = sum(int(a.size) * a.dtype.itemsize for a in inputs)
    out_bytes = (num_steps * B * O_pad + 2 * L * B * H) * 4
    scratch_bytes = 2 * L * B * H * 4

    # Explicit scoped-VMEM budget: actual residency + headroom (clamped for v7x).
    vmem_limit = int(min(96 * 2 ** 20,
                         max(32 * 2 ** 20,
                             2 * (in_bytes + out_bytes + scratch_bytes))))

    vmem = pl.BlockSpec(memory_space=pltpu.MemorySpace.VMEM)
    pred_p, h_new, c_new = pl.pallas_call(
        _make_decoder_kernel(L, H, O, num_steps, compute_dtype),
        out_shape=(
            jax.ShapeDtypeStruct((num_steps, B, O_pad), jnp.float32),
            jax.ShapeDtypeStruct((L, B, H), jnp.float32),
            jax.ShapeDtypeStruct((L, B, H), jnp.float32),
        ),
        in_specs=[vmem] * len(inputs),
        out_specs=(vmem, vmem, vmem),
        scratch_shapes=[pltpu.VMEM((L, B, H), jnp.float32),
                        pltpu.VMEM((L, B, H), jnp.float32)],
        input_output_aliases={1: 1, 2: 2},   # in-place hidden/cell update
        compiler_params=pltpu.CompilerParams(vmem_limit_bytes=vmem_limit),
        cost_estimate=pl.CostEstimate(flops=flops,
                                      transcendentals=transcendentals,
                                      bytes_accessed=in_bytes + out_bytes),
    )(*inputs)
    return pred_p[:, :, :O], h_new, c_new


def decoder_forward(x, hidden, cell, prepped):
    """Single decode step — exact semantics of Decoder.forward (eval mode)."""
    pred, h_new, c_new = decoder_decode(x, hidden, cell, prepped, num_steps=1)
    return pred[0], h_new, c_new


# --------------------------------------------------------------------------- #
# Pure-JAX references (torch semantics, eval mode)
# --------------------------------------------------------------------------- #
def decoder_reference(x, hidden, cell, params):
    emb = x @ params["w_emb"].T + params["b_emb"]
    inp = emb
    h_out, c_out = [], []
    H = hidden.shape[-1]
    for l, (wih, whh, bih, bhh) in enumerate(params["layers"]):
        gates = inp @ wih.T + bih + hidden[l] @ whh.T + bhh
        i_g = jax.nn.sigmoid(gates[:, 0 * H:1 * H])
        f_g = jax.nn.sigmoid(gates[:, 1 * H:2 * H])
        g_g = jnp.tanh(gates[:, 2 * H:3 * H])
        o_g = jax.nn.sigmoid(gates[:, 3 * H:4 * H])
        c_new = f_g * cell[l] + i_g * g_g
        h_new = o_g * jnp.tanh(c_new)
        h_out.append(h_new)
        c_out.append(c_new)
        inp = h_new
    pred = inp @ params["w_out"].T + params["b_out"]
    return pred, jnp.stack(h_out), jnp.stack(c_out)


def decoder_rollout_reference(x, hidden, cell, params, num_steps):
    preds, inp, h, c = [], x, hidden, cell
    for _ in range(num_steps):
        p, h, c = decoder_reference(inp, h, c, params)
        preds.append(p)
        inp = p
    return jnp.stack(preds), h, c


# --------------------------------------------------------------------------- #
if __name__ == "__main__":
    B = 8    # batch size
    O = 4    # output_size (feature size of x)
    E = 16   # embedding_size
    H = 32   # hidden_size
    L = 2    # num_layers
    T = 4    # autoregressive decode steps for the multi-step test

    key = jax.random.PRNGKey(0)
    keys = jax.random.split(key, 16)
    ki = iter(keys)

    def u(k, shape, scale=0.1):
        return jax.random.uniform(k, shape, jnp.float32, -scale, scale)

    params = {
        "w_emb": u(next(ki), (E, O)),
        "b_emb": u(next(ki), (E,)),
        "layers": [],
        "w_out": u(next(ki), (O, H)),
        "b_out": u(next(ki), (O,)),
    }
    for l in range(L):
        in_l = E if l == 0 else H
        params["layers"].append((
            u(next(ki), (4 * H, in_l)),   # weight_ih_l{l}
            u(next(ki), (4 * H, H)),      # weight_hh_l{l}
            u(next(ki), (4 * H,)),        # bias_ih_l{l}
            u(next(ki), (4 * H,)),        # bias_hh_l{l}
        ))

    x = jax.random.normal(next(ki), (B, O), jnp.float32)
    hidden = jax.random.normal(next(ki), (L, B, H), jnp.float32)
    cell = jax.random.normal(next(ki), (L, B, H), jnp.float32)

    # References first (pure JAX; no donation has happened yet).
    pred_r, h_r, c_r = decoder_reference(x, hidden, cell, params)
    predT_r, hT_r, cT_r = decoder_rollout_reference(x, hidden, cell, params, T)

    # One-time parameter prep (hoisted out of the per-step path).
    prepped_f32 = prepare_params(params, compute_dtype=jnp.float32)
    prepped_bf16 = prepare_params(params, compute_dtype=jnp.bfloat16)

    # ---- single step, exact f32 (module forward semantics) ----
    pred, h_new, c_new = decoder_forward(x, jnp.copy(hidden), jnp.copy(cell),
                                         prepped_f32)
    jax.block_until_ready((pred, h_new, c_new))
    assert jnp.allclose(pred, pred_r, atol=1e-5, rtol=1e-5), "prediction mismatch"
    assert jnp.allclose(h_new, h_r, atol=1e-5, rtol=1e-5), "hidden mismatch"
    assert jnp.allclose(c_new, c_r, atol=1e-5, rtol=1e-5), "cell mismatch"

    # ---- T-step autoregressive decode inside ONE kernel, exact f32 ----
    predT, hT, cT = decoder_decode(x, jnp.copy(hidden), jnp.copy(cell),
                                   prepped_f32, num_steps=T)
    jax.block_until_ready((predT, hT, cT))
    assert jnp.allclose(predT, predT_r, atol=1e-5, rtol=1e-5), "rollout pred mismatch"
    assert jnp.allclose(hT, hT_r, atol=1e-5, rtol=1e-5), "rollout hidden mismatch"
    assert jnp.allclose(cT, cT_r, atol=1e-5, rtol=1e-5), "rollout cell mismatch"

    # ---- single step, bf16 weights (MXU-native; f32 accumulation) ----
    pred_b, h_b, c_b = decoder_forward(x, jnp.copy(hidden), jnp.copy(cell),
                                       prepped_bf16)
    jax.block_until_ready((pred_b, h_b, c_b))
    assert jnp.allclose(pred_b, pred_r, atol=1e-1), "bf16 prediction mismatch"
    assert jnp.allclose(h_b, h_r, atol=1e-1), "bf16 hidden mismatch"
    assert jnp.allclose(c_b, c_r, atol=1e-1), "bf16 cell mismatch"

    print("KERNEL_OK")
</pallas_src>

<mosaic_0001>
module attributes {stable_mosaic.version = 11 : i64} {
  func.func @kernel(%arg0: memref<8x4xf32, #tpu.memory_space<vmem>>, %arg1: memref<2x8x32xf32, #tpu.memory_space<vmem>>, %arg2: memref<2x8x32xf32, #tpu.memory_space<vmem>>, %arg3: memref<36x128xf32, #tpu.memory_space<vmem>>, %arg4: memref<1x128xf32, #tpu.memory_space<vmem>>, %arg5: memref<64x128xf32, #tpu.memory_space<vmem>>, %arg6: memref<1x128xf32, #tpu.memory_space<vmem>>, %arg7: memref<32x128xf32, #tpu.memory_space<vmem>>, %arg8: memref<1x128xf32, #tpu.memory_space<vmem>>, %arg9: memref<1x8x128xf32, #tpu.memory_space<vmem>>, %arg10: memref<2x8x32xf32, #tpu.memory_space<vmem>>, %arg11: memref<2x8x32xf32, #tpu.memory_space<vmem>>, %arg12: memref<2x8x32xf32, #tpu.memory_space<vmem>>, %arg13: memref<2x8x32xf32, #tpu.memory_space<vmem>>) attributes {dimension_semantics = [], scalar_prefetch = 0 : i64, scratch_operands = 2 : i64, tpu.core_type = #tpu.core_type<tc>} {
    %c0 = arith.constant 0 : index
    %c0_0 = arith.constant 0 : index
    %c0_1 = arith.constant 0 : index
    %0 = vector.load %arg1[%c0, %c0_0, %c0_1] : memref<2x8x32xf32, #tpu.memory_space<vmem>>, vector<2x8x32xf32>
    %c0_2 = arith.constant 0 : index
    %c0_3 = arith.constant 0 : index
    %c0_4 = arith.constant 0 : index
    %1 = vector.load %arg12[%c0_2, %c0_3, %c0_4] : memref<2x8x32xf32, #tpu.memory_space<vmem>>, vector<2x8x32xf32>
    tpu.vector_store %arg12[%c0_2, %c0_3, %c0_4], %0 {strides = array<i32>} : memref<2x8x32xf32, #tpu.memory_space<vmem>>, vector<2x8x32xf32>,
    %c0_5 = arith.constant 0 : index
    %c0_6 = arith.constant 0 : index
    %c0_7 = arith.constant 0 : index
    %2 = vector.load %arg2[%c0_5, %c0_6, %c0_7] : memref<2x8x32xf32, #tpu.memory_space<vmem>>, vector<2x8x32xf32>
    %c0_8 = arith.constant 0 : index
    %c0_9 = arith.constant 0 : index
    %c0_10 = arith.constant 0 : index
    %3 = vector.load %arg13[%c0_8, %c0_9, %c0_10] : memref<2x8x32xf32, #tpu.memory_space<vmem>>, vector<2x8x32xf32>
    tpu.vector_store %arg13[%c0_8, %c0_9, %c0_10], %2 {strides = array<i32>} : memref<2x8x32xf32, #tpu.memory_space<vmem>>, vector<2x8x32xf32>,
    %c0_11 = arith.constant 0 : index
    %c0_12 = arith.constant 0 : index
    %4 = vector.load %arg0[%c0_11, %c0_12] : memref<8x4xf32, #tpu.memory_space<vmem>>, vector<8x4xf32>
    %c0_13 = arith.constant 0 : index
    %c0_14 = arith.constant 0 : index
    %5 = vector.load %arg3[%c0_13, %c0_14] : memref<36x128xf32, #tpu.memory_space<vmem>>, vector<36x128xf32>
    %c0_15 = arith.constant 0 : index
    %c0_16 = arith.constant 0 : index
    %6 = vector.load %arg4[%c0_15, %c0_16] : memref<1x128xf32, #tpu.memory_space<vmem>>, vector<1x128xf32>
    %c0_17 = arith.constant 0 : index
    %c0_18 = arith.constant 0 : index
    %c0_19 = arith.constant 0 : index
    %7 = vector.load %arg12[%c0_17, %c0_18, %c0_19] : memref<2x8x32xf32, #tpu.memory_space<vmem>>, vector<1x8x32xf32>
    %8 = vector.shape_cast %7 : vector<1x8x32xf32> to vector<8x32xf32>
    %c0_20 = arith.constant 0 : index
    %c0_21 = arith.constant 0 : index
    %c0_22 = arith.constant 0 : index
    %9 = vector.load %arg13[%c0_20, %c0_21, %c0_22] : memref<2x8x32xf32, #tpu.memory_space<vmem>>, vector<1x8x32xf32>
    %10 = vector.shape_cast %9 : vector<1x8x32xf32> to vector<8x32xf32>
    %11 = tpu.concatenate %4, %8 in 1 : vector<8x4xf32>, vector<8x32xf32> -> vector<8x36xf32>
    %cst = arith.constant dense<0.000000e+00> : vector<8x128xf32>
    %12 = tpu.matmul %11, %5, %cst {dimension_numbers = #tpu.dot_dimension_numbers<[1], [0], [0], [1], [0, 0, 1, 1], [], []>} : vector<8x36xf32>, vector<36x128xf32>, vector<8x128xf32> -> vector<8x128xf32>
    %13 = vector.broadcast %6 : vector<1x128xf32> to vector<8x128xf32>
    %14 = arith.addf %12, %13 : vector<8x128xf32>
    %15 = vector.extract_strided_slice %14 {offsets = [0, 0], sizes = [8, 96], strides = [1, 1]} : vector<8x128xf32> to vector<8x96xf32>
    %16 = arith.negf %15 : vector<8x96xf32>
    %17 = math.exp %16 : vector<8x96xf32>
    %cst_23 = arith.constant 1.000000e+00 : f32
    %18 = vector.broadcast %cst_23 : f32 to vector<8x96xf32>
    %19 = arith.addf %18, %17 : vector<8x96xf32>
    %20 = arith.divf %18, %19 : vector<8x96xf32>
    %21 = vector.extract_strided_slice %14 {offsets = [0, 96], sizes = [8, 32], strides = [1, 1]} : vector<8x128xf32> to vector<8x32xf32>
    %22 = math.tanh %21 : vector<8x32xf32>
    %23 = vector.extract_strided_slice %20 {offsets = [0, 0], sizes = [8, 32], strides = [1, 1]} : vector<8x96xf32> to vector<8x32xf32>
    %24 = vector.extract_strided_slice %20 {offsets = [0, 32], sizes = [8, 32], strides = [1, 1]} : vector<8x96xf32> to vector<8x32xf32>
    %25 = vector.extract_strided_slice %20 {offsets = [0, 64], sizes = [8, 32], strides = [1, 1]} : vector<8x96xf32> to vector<8x32xf32>
    %26 = arith.mulf %24, %10 : vector<8x32xf32>
    %27 = arith.mulf %23, %22 : vector<8x32xf32>
    %28 = arith.addf %26, %27 : vector<8x32xf32>
    %29 = math.tanh %28 : vector<8x32xf32>
    %30 = arith.mulf %25, %29 : vector<8x32xf32>
    %c0_24 = arith.constant 0 : index
    %c0_25 = arith.constant 0 : index
    %c0_26 = arith.constant 0 : index
    %31 = vector.load %arg12[%c0_24, %c0_25, %c0_26] : memref<2x8x32xf32, #tpu.memory_space<vmem>>, vector<1x8x32xf32>
    %32 = vector.shape_cast %31 : vector<1x8x32xf32> to vector<8x32xf32>
    %33 = vector.shape_cast %30 : vector<8x32xf32> to vector<1x8x32xf32>
    tpu.vector_store %arg12[%c0_24, %c0_25, %c0_26], %33 {strides = array<i32>} : memref<2x8x32xf32, #tpu.memory_space<vmem>>, vector<1x8x32xf32>,
    %c0_27 = arith.constant 0 : index
    %c0_28 = arith.constant 0 : index
    %c0_29 = arith.constant 0 : index
    %34 = vector.load %arg13[%c0_27, %c0_28, %c0_29] : memref<2x8x32xf32, #tpu.memory_space<vmem>>, vector<1x8x32xf32>
    %35 = vector.shape_cast %34 : vector<1x8x32xf32> to vector<8x32xf32>
    %36 = vector.shape_cast %28 : vector<8x32xf32> to vector<1x8x32xf32>
    tpu.vector_store %arg13[%c0_27, %c0_28, %c0_29], %36 {strides = array<i32>} : memref<2x8x32xf32, #tpu.memory_space<vmem>>, vector<1x8x32xf32>,
    %c0_30 = arith.constant 0 : index
    %c0_31 = arith.constant 0 : index
    %37 = vector.load %arg5[%c0_30, %c0_31] : memref<64x128xf32, #tpu.memory_space<vmem>>, vector<64x128xf32>
    %c0_32 = arith.constant 0 : index
    %c0_33 = arith.constant 0 : index
    %38 = vector.load %arg6[%c0_32, %c0_33] : memref<1x128xf32, #tpu.memory_space<vmem>>, vector<1x128xf32>
    %c1 = arith.constant 1 : index
    %c0_34 = arith.constant 0 : index
    %c0_35 = arith.constant 0 : index
    %39 = vector.load %arg12[%c1, %c0_34, %c0_35] : memref<2x8x32xf32, #tpu.memory_space<vmem>>, vector<1x8x32xf32>
    %40 = vector.shape_cast %39 : vector<1x8x32xf32> to vector<8x32xf32>
    %c1_36 = arith.constant 1 : index
    %c0_37 = arith.constant 0 : index
    %c0_38 = arith.constant 0 : index
    %41 = vector.load %arg13[%c1_36, %c0_37, %c0_38] : memref<2x8x32xf32, #tpu.memory_space<vmem>>, vector<1x8x32xf32>
    %42 = vector.shape_cast %41 : vector<1x8x32xf32> to vector<8x32xf32>
    %43 = tpu.concatenate %30, %40 in 1 : vector<8x32xf32>, vector<8x32xf32> -> vector<8x64xf32>
    %cst_39 = arith.constant dense<0.000000e+00> : vector<8x128xf32>
    %44 = tpu.matmul %43, %37, %cst_39 {dimension_numbers = #tpu.dot_dimension_numbers<[1], [0], [0], [1], [0, 0, 1, 1], [], []>} : vector<8x64xf32>, vector<64x128xf32>, vector<8x128xf32> -> vector<8x128xf32>
    %45 = vector.broadcast %38 : vector<1x128xf32> to vector<8x128xf32>
    %46 = arith.addf %44, %45 : vector<8x128xf32>
    %47 = vector.extract_strided_slice %46 {offsets = [0, 0], sizes = [8, 96], strides = [1, 1]} : vector<8x128xf32> to vector<8x96xf32>
    %48 = arith.negf %47 : vector<8x96xf32>
    %49 = math.exp %48 : vector<8x96xf32>
    %cst_40 = arith.constant 1.000000e+00 : f32
    %50 = vector.broadcast %cst_40 : f32 to vector<8x96xf32>
    %51 = arith.addf %50, %49 : vector<8x96xf32>
    %52 = arith.divf %50, %51 : vector<8x96xf32>
    %53 = vector.extract_strided_slice %46 {offsets = [0, 96], sizes = [8, 32], strides = [1, 1]} : vector<8x128xf32> to vector<8x32xf32>
    %54 = math.tanh %53 : vector<8x32xf32>
    %55 = vector.extract_strided_slice %52 {offsets = [0, 0], sizes = [8, 32], strides = [1, 1]} : vector<8x96xf32> to vector<8x32xf32>
    %56 = vector.extract_strided_slice %52 {offsets = [0, 32], sizes = [8, 32], strides = [1, 1]} : vector<8x96xf32> to vector<8x32xf32>
    %57 = vector.extract_strided_slice %52 {offsets = [0, 64], sizes = [8, 32], strides = [1, 1]} : vector<8x96xf32> to vector<8x32xf32>
    %58 = arith.mulf %56, %42 : vector<8x32xf32>
    %59 = arith.mulf %55, %54 : vector<8x32xf32>
    %60 = arith.addf %58, %59 : vector<8x32xf32>
    %61 = math.tanh %60 : vector<8x32xf32>
    %62 = arith.mulf %57, %61 : vector<8x32xf32>
    %c1_41 = arith.constant 1 : index
    %c0_42 = arith.constant 0 : index
    %c0_43 = arith.constant 0 : index
    %63 = vector.load %arg12[%c1_41, %c0_42, %c0_43] : memref<2x8x32xf32, #tpu.memory_space<vmem>>, vector<1x8x32xf32>
    %64 = vector.shape_cast %63 : vector<1x8x32xf32> to vector<8x32xf32>
    %65 = vector.shape_cast %62 : vector<8x32xf32> to vector<1x8x32xf32>
    tpu.vector_store %arg12[%c1_41, %c0_42, %c0_43], %65 {strides = array<i32>} : memref<2x8x32xf32, #tpu.memory_space<vmem>>, vector<1x8x32xf32>,
    %c1_44 = arith.constant 1 : index
    %c0_45 = arith.constant 0 : index
    %c0_46 = arith.constant 0 : index
    %66 = vector.load %arg13[%c1_44, %c0_45, %c0_46] : memref<2x8x32xf32, #tpu.memory_space<vmem>>, vector<1x8x32xf32>
    %67 = vector.shape_cast %66 : vector<1x8x32xf32> to vector<8x32xf32>
    %68 = vector.shape_cast %60 : vector<8x32xf32> to vector<1x8x32xf32>
    tpu.vector_store %arg13[%c1_44, %c0_45, %c0_46], %68 {strides = array<i32>} : memref<2x8x32xf32, #tpu.memory_space<vmem>>, vector<1x8x32xf32>,
    %c0_47 = arith.constant 0 : index
    %c0_48 = arith.constant 0 : index
    %69 = vector.load %arg7[%c0_47, %c0_48] : memref<32x128xf32, #tpu.memory_space<vmem>>, vector<32x128xf32>
    %cst_49 = arith.constant dense<0.000000e+00> : vector<8x128xf32>
    %70 = tpu.matmul %62, %69, %cst_49 {dimension_numbers = #tpu.dot_dimension_numbers<[1], [0], [0], [1], [0, 0, 1, 1], [], []>} : vector<8x32xf32>, vector<32x128xf32>, vector<8x128xf32> -> vector<8x128xf32>
    %c0_50 = arith.constant 0 : index
    %c0_51 = arith.constant 0 : index
    %71 = vector.load %arg8[%c0_50, %c0_51] : memref<1x128xf32, #tpu.memory_space<vmem>>, vector<1x128xf32>
    %72 = vector.broadcast %71 : vector<1x128xf32> to vector<8x128xf32>
    %73 = arith.addf %70, %72 : vector<8x128xf32>
    %c0_52 = arith.constant 0 : index
    %c0_53 = arith.constant 0 : index
    %c0_54 = arith.constant 0 : index
    %74 = vector.load %arg9[%c0_52, %c0_53, %c0_54] : memref<1x8x128xf32, #tpu.memory_space<vmem>>, vector<1x8x128xf32>
    %75 = vector.shape_cast %74 : vector<1x8x128xf32> to vector<8x128xf32>
    %76 = vector.shape_cast %73 : vector<8x128xf32> to vector<1x8x128xf32>
    tpu.vector_store %arg9[%c0_52, %c0_53, %c0_54], %76 {strides = array<i32>} : memref<1x8x128xf32, #tpu.memory_space<vmem>>, vector<1x8x128xf32>,
    %c0_55 = arith.constant 0 : index
    %c0_56 = arith.constant 0 : index
    %c0_57 = arith.constant 0 : index
    %77 = vector.load %arg12[%c0_55, %c0_56, %c0_57] : memref<2x8x32xf32, #tpu.memory_space<vmem>>, vector<2x8x32xf32>
    %c0_58 = arith.constant 0 : index
    %c0_59 = arith.constant 0 : index
    %c0_60 = arith.constant 0 : index
    %78 = vector.load %arg10[%c0_58, %c0_59, %c0_60] : memref<2x8x32xf32, #tpu.memory_space<vmem>>, vector<2x8x32xf32>
    tpu.vector_store %arg10[%c0_58, %c0_59, %c0_60], %77 {strides = array<i32>} : memref<2x8x32xf32, #tpu.memory_space<vmem>>, vector<2x8x32xf32>,
    %c0_61 = arith.constant 0 : index
    %c0_62 = arith.constant 0 : index
    %c0_63 = arith.constant 0 : index
    %79 = vector.load %arg13[%c0_61, %c0_62, %c0_63] : memref<2x8x32xf32, #tpu.memory_space<vmem>>, vector<2x8x32xf32>
    %c0_64 = arith.constant 0 : index
    %c0_65 = arith.constant 0 : index
    %c0_66 = arith.constant 0 : index
    %80 = vector.load %arg11[%c0_64, %c0_65, %c0_66] : memref<2x8x32xf32, #tpu.memory_space<vmem>>, vector<2x8x32xf32>
    tpu.vector_store %arg11[%c0_64, %c0_65, %c0_66], %79 {strides = array<i32>} : memref<2x8x32xf32, #tpu.memory_space<vmem>>, vector<2x8x32xf32>,
    return
  }
}

</mosaic_0001>

<llo_original>
// kernel: tpu_custom_call.1
$region0: #{tpu_custom_call.1}
  #allocation0 [shape = 'u32[]', space=smem, size = 0x4, offset = 0x4, fixed_abs, tag = 'smem constant byte address 0x4 - core index']
  #allocation1 [shape = 'u32[144,128]{1,0:T(1,128)}', space=vmem, size = 0x12000, scoped, tag = 'internal scratch']
  #allocation2 [shape = 'f32[2,8,32]{2,1,0:T(8,128)}', space=vmem, size = 0x2000, scoped, tag = 'scratch operand']
  #allocation3 [shape = 'f32[2,8,32]{2,1,0:T(8,128)}', space=vmem, size = 0x2000, scoped, tag = 'scratch operand']
  %s0 = inlined_call_operand.vmem [shape: f32[8,4], index: 0, kind: input, shape index: {}]
  %s1 = inlined_call_operand.hbm [shape: f32[2,8,32], index: 1, kind: input, shape index: {}, may-alias: {1,10}]
  %s2 = inlined_call_operand.hbm [shape: f32[2,8,32], index: 2, kind: input, shape index: {}, may-alias: {2,11}]
  %s3 = inlined_call_operand.hbm [shape: f32[36,128], index: 3, kind: input, shape index: {}]
  %s4 = inlined_call_operand.vmem [shape: f32[1,128], index: 4, kind: input, shape index: {}]
  %s5 = inlined_call_operand.vmem [shape: f32[64,128], index: 5, kind: input, shape index: {}]
  %s6 = inlined_call_operand.vmem [shape: f32[1,128], index: 6, kind: input, shape index: {}]
  %s7 = inlined_call_operand.hbm [shape: f32[32,128], index: 7, kind: input, shape index: {}]
  %s8 = inlined_call_operand.hbm [shape: f32[1,128], index: 8, kind: input, shape index: {}]
  %s9 = inlined_call_operand.hbm [shape: f32[1,8,128], index: 9, kind: output, shape index: {0}]
  %s10 = inlined_call_operand.hbm [shape: f32[2,8,32], index: 10, kind: output, shape index: {1}, may-alias: {1,10}]
  %s11 = inlined_call_operand.hbm [shape: f32[2,8,32], index: 11, kind: output, shape index: {2}, may-alias: {2,11}]
  %12 = xla_tuple %s9, %s10, %s11
  %s13 = sld [smem:[#allocation0]]
  $region82: #{tpu_custom_call.1} parent=0
    _
  %s15 = ssub.s32 1, %s13
  %s16 = scalar_select 0, %s15, %s13
  $region1: #{tpu_custom_call.1} parent=0
    #allocation4 [shape = 'u8[8192]{0}', space=vmem, size = 0x2000, scoped, tag = 'input window, operand 1, single buffered']
    #allocation5 [shape = 's32[1]{0}', space=sflag, size = 0x4, scoped, tag = 'scoped memory for tpu_custom_call.1']
    #allocation6 [shape = 's32[1]{0}', space=sflag, size = 0x4, scoped, tag = 'scoped memory for tpu_custom_call.1']
    #allocation7 [shape = 'u8[8192]{0}', space=vmem, size = 0x2000, scoped, tag = 'input window, operand 2, single buffered']
    #allocation8 [shape = 's32[1]{0}', space=sflag, size = 0x4, scoped, tag = 'scoped memory for tpu_custom_call.1']
    #allocation9 [shape = 'u8[20480]{0}', space=vmem, size = 0x5000, scoped, tag = 'input window, operand 3, single buffered']
    #allocation10 [shape = 'u8[16384]{0}', space=vmem, size = 0x4000, scoped, tag = 'input window, operand 7, single buffered']
    #allocation11 [shape = 's32[1]{0}', space=sflag, size = 0x4, scoped, tag = 'scoped memory for tpu_custom_call.1']
    #allocation12 [shape = 'u8[512]{0}', space=vmem, size = 0x400, scoped, tag = 'input window, operand 8, single buffered']
    #allocation13 [shape = 'u8[4096]{0}', space=vmem, size = 0x1000, scoped, tag = 'output window, operand 0, single buffered']
    #allocation14 [shape = 'u8[8192]{0}', space=vmem, size = 0x2000, scoped, tag = 'output window, operand 1, single buffered']
    #allocation15 [shape = 's32[1]{0}', space=sflag, size = 0x4, scoped, tag = 'scoped memory for tpu_custom_call.1']
    #allocation16 [shape = 'u8[8192]{0}', space=vmem, size = 0x2000, scoped, tag = 'output window, operand 2, single buffered']
    %17 = vsyncpa [#allocation5], 0
    %18 = vsyncpa [#allocation8], 0
    %19 = vsyncpa [#allocation11], 0
    %20 = vsyncpa [#allocation6], 0
    %21 = vsyncpa [#allocation15], 0
    // Predicated region
    $region2: #{tpu_custom_call.1} parent=1 // pred_check
      _
    $region3: #{tpu_custom_call.1} parent=1 // pred_check_branch
      %23 = sbr.rel (0) target = $region5
    $region4: #{tpu_custom_call.1} parent=1 // pred_region
      _
    $region5: #{tpu_custom_call.1} parent=1 // pred_fallthru
      _
    // Predicated region
    $region6: #{tpu_custom_call.1} parent=1 // pred_check
      _
    $region7: #{tpu_custom_call.1} parent=1 // pred_check_branch
      %25 = sbr.rel (0) target = $region9
    $region8: #{tpu_custom_call.1} parent=1 // pred_region
      %s27 = ssub.s32 256, 256
      %28 = vsyncadd [#allocation5], %s27
      %s29 = sshll.u32 [#allocation4], 4
      %s30 = int_to_ptr.vmem [resolvable:$true] %s29
      %35 = dma.hbm_to_vmem [thread:$0]  %s1, 256, %s30, [#allocation5], 128, 128, 8
    $region9: #{tpu_custom_call.1} parent=1 // pred_fallthru
      _
    // Predicated region
    $region10: #{tpu_custom_call.1} parent=1 // pred_check
      _
    $region11: #{tpu_custom_call.1} parent=1 // pred_check_branch
      %37 = sbr.rel (0) target = $region13
    $region12: #{tpu_custom_call.1} parent=1 // pred_region
      %s39 = ssub.s32 256, 256
      %40 = vsyncadd [#allocation8], %s39
      %s41 = sshll.u32 [#allocation7], 4
      %s42 = int_to_ptr.vmem [resolvable:$true] %s41
      %47 = dma.hbm_to_vmem [thread:$0]  %s2, 256, %s42, [#allocation8], 128, 128, 8
    $region13: #{tpu_custom_call.1} parent=1 // pred_fallthru
      _
    // Predicated region
    $region14: #{tpu_custom_call.1} parent=1 // pred_check
      _
    $region15: #{tpu_custom_call.1} parent=1 // pred_check_branch
      %49 = sbr.rel (0) target = $region17
    $region16: #{tpu_custom_call.1} parent=1 // pred_region
      %s51 = ssub.s32 640, 640
      %52 = vsyncadd [#allocation8], %s51
      %s53 = sshll.u32 [#allocation9], 4
      %s54 = int_to_ptr.vmem [resolvable:$true] %s53
      %59 = dma.hbm_to_vmem [thread:$0]  %s3, 640, %s54, [#allocation8], 128, 128, 8
    $region17: #{tpu_custom_call.1} parent=1 // pred_fallthru
      _
    // Predicated region
    $region18: #{tpu_custom_call.1} parent=1 // pred_check
      _
    $region19: #{tpu_custom_call.1} parent=1 // pred_check_branch
      %61 = sbr.rel (0) target = $region21
    $region20: #{tpu_custom_call.1} parent=1 // pred_region
      _
    $region21: #{tpu_custom_call.1} parent=1 // pred_fallthru
      _
    // Predicated region
    $region22: #{tpu_custom_call.1} parent=1 // pred_check
      _
    $region23: #{tpu_custom_call.1} parent=1 // pred_check_branch
      %63 = sbr.rel (0) target = $region25
    $region24: #{tpu_custom_call.1} parent=1 // pred_region
      _
    $region25: #{tpu_custom_call.1} parent=1 // pred_fallthru
      _
    // Predicated region
    $region26: #{tpu_custom_call.1} parent=1 // pred_check
      _
    $region27: #{tpu_custom_call.1} parent=1 // pred_check_branch
      %65 = sbr.rel (0) target = $region29
    $region28: #{tpu_custom_call.1} parent=1 // pred_region
      _
    $region29: #{tpu_custom_call.1} parent=1 // pred_fallthru
      _
    // Predicated region
    $region30: #{tpu_custom_call.1} parent=1 // pred_check
      _
    $region31: #{tpu_custom_call.1} parent=1 // pred_check_branch
      %67 = sbr.rel (0) target = $region33
    $region32: #{tpu_custom_call.1} parent=1 // pred_region
      %s69 = ssub.s32 512, 512
      %70 = vsyncadd [#allocation11], %s69
      %s71 = sshll.u32 [#allocation10], 4
      %s72 = int_to_ptr.vmem [resolvable:$true] %s71
      %77 = dma.hbm_to_vmem [thread:$0]  %s7, 512, %s72, [#allocation11], 128, 128, 8
    $region33: #{tpu_custom_call.1} parent=1 // pred_fallthru
      _
    // Predicated region
    $region34: #{tpu_custom_call.1} parent=1 // pred_check
      _
    $region35: #{tpu_custom_call.1} parent=1 // pred_check_branch
      %79 = sbr.rel (0) target = $region37
    $region36: #{tpu_custom_call.1} parent=1 // pred_region
      %s81 = ssub.s32 16, 16
      %82 = vsyncadd [#allocation11], %s81
      %s84 = sshll.u32 [#allocation12], 4
      %s85 = int_to_ptr.vmem [resolvable:$true] %s84
      %87 = dma.hbm_to_vmem [thread:$0]  %s8, 16, %s85, [#allocation11]
    $region37: #{tpu_custom_call.1} parent=1 // pred_fallthru
      _
    // Predicated region
    $region38: #{tpu_custom_call.1} parent=1 // pred_check
      _
    $region39: #{tpu_custom_call.1} parent=1 // pred_check_branch
      %89 = sbr.rel (0) target = $region41
    $region40: #{tpu_custom_call.1} parent=1 // pred_region
      %90 = dma.done [#allocation5], 256
    $region41: #{tpu_custom_call.1} parent=1 // pred_fallthru
      _
    // Predicated region
    $region42: #{tpu_custom_call.1} parent=1 // pred_check
      _
    $region43: #{tpu_custom_call.1} parent=1 // pred_check_branch
      %92 = sbr.rel (0) target = $region45
    $region44: #{tpu_custom_call.1} parent=1 // pred_region
      %93 = dma.done [#allocation8], 256
    $region45: #{tpu_custom_call.1} parent=1 // pred_fallthru
      _
    // Predicated region
    $region46: #{tpu_custom_call.1} parent=1 // pred_check
      _
    $region47: #{tpu_custom_call.1} parent=1 // pred_check_branch
      %95 = sbr.rel (0) target = $region49
    $region48: #{tpu_custom_call.1} parent=1 // pred_region
      %96 = dma.done [#allocation8], 640
    $region49: #{tpu_custom_call.1} parent=1 // pred_fallthru
      _
    // Predicated region
    $region50: #{tpu_custom_call.1} parent=1 // pred_check
      _
    $region51: #{tpu_custom_call.1} parent=1 // pred_check_branch
      %98 = sbr.rel (0) target = $region53
    $region52: #{tpu_custom_call.1} parent=1 // pred_region
      %99 = dma.done [#allocation11], 512
    $region53: #{tpu_custom_call.1} parent=1 // pred_fallthru
      _
    // Predicated region
    $region54: #{tpu_custom_call.1} parent=1 // pred_check
      _
    $region55: #{tpu_custom_call.1} parent=1 // pred_check_branch
      %101 = sbr.rel (0) target = $region57
    $region56: #{tpu_custom_call.1} parent=1 // pred_region
      %102 = dma.done [#allocation11], 16
    $region57: #{tpu_custom_call.1} parent=1 // pred_fallthru
      _
    %v103 = vld [vmem:[#allocation4] sm:$0xff]
    %v104 = vld [vmem:[#allocation4 + $0x8] sm:$0xff]
    %vm105 = vcmask 261120
    %106 = vst.msk [vmem:[#allocation2] sm:$0xff] %vm105, %v103
    %107 = vst.msk [vmem:[#allocation2 + $0x8] sm:$0xff] %vm105, %v104
    %v108 = vld [vmem:[#allocation7] sm:$0xff]
    %v109 = vld [vmem:[#allocation7 + $0x8] sm:$0xff]
    %110 = vst.msk [vmem:[#allocation3] sm:$0xff] %vm105, %v108
    %111 = vst.msk [vmem:[#allocation3 + $0x8] sm:$0xff] %vm105, %v109
    %v112 = vld [vmem:[%s0] sm:$0xff]
    %v113 = vld [vmem:[#allocation9] sm:$0xff]
    %v114 = vld [vmem:[#allocation9 + $0x8] sm:$0xff]
    %v115 = vld [vmem:[#allocation9 + $0x10] sm:$0xff]
    %v116 = vld [vmem:[#allocation9 + $0x18] sm:$0xff]
    %v117 = vld [vmem:[#allocation9 + $0x20] sm:$0xf]
    %v118 = vld [vmem:[%s4] sm:$0x1]
    %v119 = vld [vmem:[#allocation2] sm:$0xff]
    %v120 = vld [vmem:[#allocation3] sm:$0xff]
    %122 = vrot.lane.b32.xlu0 %v119, 4
    %v123 = vpop.permute.xlu0 %122
    %vm125 = vcmask 31744
    %v126 = vsel %vm125, %v112, %v123
    %v128 = vlaneseq
    %v129 = vshrl.u32 %v128, 7
    %v130 = vsub.s32 0, %v129
    %v131 = vrot.slane %v118, %v130
    %vm133 = vcmask 293888
    %v135 = vsel %vm133, %v126, 0
    %vm137 = vcmask 1043456
    %v139 = vsel %vm137, %v117, 0
    %141 = vmatprep.subr.mxu0 0.0
    %142 = vmatpush1.msra.mxu0 %v113
    %143 = vmatprep.subr.mxu0 0.0
    %144 = vmatpush1.msra.mxu0 %v114
    %145 = vmatprep.subr.mxu0 0.0
    %146 = vmatpush1.msra.mxu0 %v115
    %147 = vmatprep.subr.mxu0 0.0
    %148 = vmatpush1.msra.mxu0 %v116
    %149 = vmatprep.subr.mxu0 0.0
    %150 = vmatpush1.msra.mxu0 %v139
    %151 = vmatprep.subr.mxu0 0.0
    %152 = vmatpush1.msra.mxu0 0.0
    %153 = vmatprep.subr.mxu0 0.0
    %154 = vmatpush1.msra.mxu0 0.0
    %155 = vmatprep.subr.mxu0 0.0
    %156 = vmatpush1.msra.mxu0 0.0
    %157 = vmatprep.subr.mxu0 0.0
    %158 = vmatpush1.msra.mxu0 0.0
    %159 = vmatprep.subr.mxu0 0.0
    %160 = vmatpush1.msra.mxu0 0.0
    %161 = vmatprep.subr.mxu0 0.0
    %162 = vmatpush1.msra.mxu0 0.0
    %163 = vmatprep.subr.mxu0 0.0
    %164 = vmatpush1.msra.mxu0 0.0
    %165 = vmatprep.subr.mxu0 0.0
    %166 = vmatpush1.msra.mxu0 0.0
    %167 = vmatprep.subr.mxu0 0.0
    %168 = vmatpush1.msra.mxu0 0.0
    %169 = vmatprep.subr.mxu0 0.0
    %170 = vmatpush1.msra.mxu0 0.0
    %171 = vmatprep.subr.mxu0 0.0
    %172 = vmatpush1.msra.mxu0 0.0
    %173 = vmatprep.subr.mxu0 0.0
    %174 = vmatpush1.msra.mxu0 0.0
    %175 = vmatprep.subr.mxu0 0.0
    %176 = vmatpush1.msra.mxu0 0.0
    %177 = vmatprep.subr.mxu0 0.0
    %178 = vmatpush1.msra.mxu0 0.0
    %179 = vmatprep.subr.mxu0 0.0
    %180 = vmatpush1.msra.mxu0 0.0
    %181 = vmatprep.subr.mxu0 0.0
    %182 = vmatpush1.msra.mxu0 0.0
    %183 = vmatprep.subr.mxu0 0.0
    %184 = vmatpush1.msra.mxu0 0.0
    %185 = vmatprep.subr.mxu0 0.0
    %186 = vmatpush1.msra.mxu0 0.0
    %187 = vmatprep.subr.mxu0 0.0
    %188 = vmatpush1.msra.mxu0 0.0
    %189 = vmatprep.subr.mxu0 0.0
    %190 = vmatpush1.msra.mxu0 0.0
    %191 = vmatprep.subr.mxu0 0.0
    %192 = vmatpush1.msra.mxu0 0.0
    %193 = vmatprep.subr.mxu0 0.0
    %194 = vmatpush1.msra.mxu0 0.0
    %195 = vmatprep.subr.mxu0 0.0
    %196 = vmatpush1.msra.mxu0 0.0
    %197 = vmatprep.subr.mxu0 0.0
    %198 = vmatpush1.msra.mxu0 0.0
    %199 = vmatprep.subr.mxu0 0.0
    %200 = vmatpush1.msra.mxu0 0.0
    %201 = vmatprep.subr.mxu0 0.0
    %202 = vmatpush1.msra.mxu0 0.0
    %203 = vmatprep.subr.mxu0 0.0
    %204 = vmatpush1.msra.mxu0 0.0
    %205 = vmatprep.mubr.f32.mxu0 0.0
    %206 = vmatmul.mubr.f32.gmra.mrb[0].mxu0 %v135
    %v207 = vpop.f32.mrb[0].mxu0
    %v208 = vadd.f32 %v131, %v207
    %v209 = vpop.f32.mrb[0].mxu0
    %210 = vdwg.mxu0
    %v211 = vxor.u32 %v208, 2147483648
    %v212 = vmul.f32 %v211, 1.442695
    %v213 = vpow.pop %v212
    %v214 = vadd.f32 %v213, 1.0
    %v215 = vrcp.pop %v214
    %v216 = vmul.f32 1.0, %v215
    %v217 = vtanh.pop %v208
    %219 = vrot.lane.b32.xlu0 %v120, 32
    %v220 = vpop.permute.xlu0 %219
    %v222 = vmul.f32 %v216, %v220
    %224 = vrot.lane.b32.xlu0 %v217, 32
    %v225 = vpop.permute.xlu0 %224
    %v227 = vmul.f32 %v216, %v225
    %229 = vrot.lane.b32.xlu0 %v227, 32
    %v230 = vpop.permute.xlu0 %229
    %v232 = vadd.f32 %v222, %v230
    %v233 = vtanh.pop %v232
    %235 = vrot.lane.b32.xlu0 %v233, 32
    %v236 = vpop.permute.xlu0 %235
    %v238 = vmul.f32 %v216, %v236
    %240 = vrot.lane.b32.xlu0 %v238, 64
    %v241 = vpop.permute.xlu0 %240
    %243 = vst.msk [vmem:[#allocation2] sm:$0xff] %vm105, %v241
    %245 = vrot.lane.b32.xlu0 %v232, 96
    %v246 = vpop.permute.xlu0 %245
    %248 = vst.msk [vmem:[#allocation3] sm:$0xff] %vm105, %v246
    %v249 = vld [vmem:[%s5] sm:$0xff]
    %v250 = vld [vmem:[%s5 + $0x8] sm:$0xff]
    %v251 = vld [vmem:[%s5 + $0x10] sm:$0xff]
    %v252 = vld [vmem:[%s5 + $0x18] sm:$0xff]
    %v253 = vld [vmem:[%s5 + $0x20] sm:$0xff]
    %v254 = vld [vmem:[%s5 + $0x28] sm:$0xff]
    %v255 = vld [vmem:[%s5 + $0x30] sm:$0xff]
    %v256 = vld [vmem:[%s5 + $0x38] sm:$0xff]
    %v257 = vld [vmem:[%s6] sm:$0x1]
    %s258 = scalar_lea.vmem [#allocation2], 8
    %v259 = vld [vmem:[%s258] sm:$0xff]
    %s260 = scalar_lea.vmem [#allocation3], 8
    %v261 = vld [vmem:[%s260] sm:$0xff]
    %263 = vrot.lane.b32.xlu0 %v259, 32
    %v264 = vpop.permute.xlu0 %263
    %v266 = vsel %vm105, %v241, %v264
    %v268 = vlaneseq
    %v269 = vshrl.u32 %v268, 7
    %v270 = vsub.s32 0, %v269
    %v271 = vrot.slane %v257, %v270
    %vm273 = vcmask 523264
    %v275 = vsel %vm273, %v266, 0
    %277 = vmatprep.subr.mxu0 0.0
    %278 = vmatpush1.msra.mxu0 %v249
    %279 = vmatprep.subr.mxu0 0.0
    %280 = vmatpush1.msra.mxu0 %v250
    %281 = vmatprep.subr.mxu0 0.0
    %282 = vmatpush1.msra.mxu0 %v251
    %283 = vmatprep.subr.mxu0 0.0
    %284 = vmatpush1.msra.mxu0 %v252
    %285 = vmatprep.subr.mxu0 0.0
    %286 = vmatpush1.msra.mxu0 %v253
    %287 = vmatprep.subr.mxu0 0.0
    %288 = vmatpush1.msra.mxu0 %v254
    %289 = vmatprep.subr.mxu0 0.0
    %290 = vmatpush1.msra.mxu0 %v255
    %291 = vmatprep.subr.mxu0 0.0
    %292 = vmatpush1.msra.mxu0 %v256
    %293 = vmatprep.subr.mxu0 0.0
    %294 = vmatpush1.msra.mxu0 0.0
    %295 = vmatprep.subr.mxu0 0.0
    %296 = vmatpush1.msra.mxu0 0.0
    %297 = vmatprep.subr.mxu0 0.0
    %298 = vmatpush1.msra.mxu0 0.0
    %299 = vmatprep.subr.mxu0 0.0
    %300 = vmatpush1.msra.mxu0 0.0
    %301 = vmatprep.subr.mxu0 0.0
    %302 = vmatpush1.msra.mxu0 0.0
    %303 = vmatprep.subr.mxu0 0.0
    %304 = vmatpush1.msra.mxu0 0.0
    %305 = vmatprep.subr.mxu0 0.0
    %306 = vmatpush1.msra.mxu0 0.0
    %307 = vmatprep.subr.mxu0 0.0
    %308 = vmatpush1.msra.mxu0 0.0
    %309 = vmatprep.subr.mxu0 0.0
    %310 = vmatpush1.msra.mxu0 0.0
    %311 = vmatprep.subr.mxu0 0.0
    %312 = vmatpush1.msra.mxu0 0.0
    %313 = vmatprep.subr.mxu0 0.0
    %314 = vmatpush1.msra.mxu0 0.0
    %315 = vmatprep.subr.mxu0 0.0
    %316 = vmatpush1.msra.mxu0 0.0
    %317 = vmatprep.subr.mxu0 0.0
    %318 = vmatpush1.msra.mxu0 0.0
    %319 = vmatprep.subr.mxu0 0.0
    %320 = vmatpush1.msra.mxu0 0.0
    %321 = vmatprep.subr.mxu0 0.0
    %322 = vmatpush1.msra.mxu0 0.0
    %323 = vmatprep.subr.mxu0 0.0
    %324 = vmatpush1.msra.mxu0 0.0
    %325 = vmatprep.subr.mxu0 0.0
    %326 = vmatpush1.msra.mxu0 0.0
    %327 = vmatprep.subr.mxu0 0.0
    %328 = vmatpush1.msra.mxu0 0.0
    %329 = vmatprep.subr.mxu0 0.0
    %330 = vmatpush1.msra.mxu0 0.0
    %331 = vmatprep.subr.mxu0 0.0
    %332 = vmatpush1.msra.mxu0 0.0
    %333 = vmatprep.subr.mxu0 0.0
    %334 = vmatpush1.msra.mxu0 0.0
    %335 = vmatprep.subr.mxu0 0.0
    %336 = vmatpush1.msra.mxu0 0.0
    %337 = vmatprep.subr.mxu0 0.0
    %338 = vmatpush1.msra.mxu0 0.0
    %339 = vmatprep.subr.mxu0 0.0
    %340 = vmatpush1.msra.mxu0 0.0
    %341 = vmatprep.mubr.f32.mxu0 0.0
    %342 = vmatmul.mubr.f32.gmra.mrb[0].mxu0 %v275
    %v343 = vpop.f32.mrb[0].mxu0
    %v344 = vadd.f32 %v271, %v343
    %v345 = vpop.f32.mrb[0].mxu0
    %346 = vdwg.mxu0
    %v347 = vxor.u32 %v344, 2147483648
    %v348 = vmul.f32 %v347, 1.442695
    %v349 = vpow.pop %v348
    %v350 = vadd.f32 %v349, 1.0
    %v351 = vrcp.pop %v350
    %v352 = vmul.f32 1.0, %v351
    %v353 = vtanh.pop %v344
    %355 = vrot.lane.b32.xlu0 %v261, 32
    %v356 = vpop.permute.xlu0 %355
    %v358 = vmul.f32 %v352, %v356
    %360 = vrot.lane.b32.xlu0 %v353, 32
    %v361 = vpop.permute.xlu0 %360
    %v363 = vmul.f32 %v352, %v361
    %365 = vrot.lane.b32.xlu0 %v363, 32
    %v366 = vpop.permute.xlu0 %365
    %v368 = vadd.f32 %v358, %v366
    %v369 = vtanh.pop %v368
    %371 = vrot.lane.b32.xlu0 %v369, 32
    %v372 = vpop.permute.xlu0 %371
    %v374 = vmul.f32 %v352, %v372
    %376 = vrot.lane.b32.xlu0 %v374, 64
    %v377 = vpop.permute.xlu0 %376
    %379 = vst.msk [vmem:[%s258] sm:$0xff] %vm105, %v377
    %381 = vrot.lane.b32.xlu0 %v368, 96
    %v382 = vpop.permute.xlu0 %381
    %384 = vst.msk [vmem:[%s260] sm:$0xff] %vm105, %v382
    %v385 = vld [vmem:[#allocation10] sm:$0xff]
    %v386 = vld [vmem:[#allocation10 + $0x8] sm:$0xff]
    %v387 = vld [vmem:[#allocation10 + $0x10] sm:$0xff]
    %v388 = vld [vmem:[#allocation10 + $0x18] sm:$0xff]
    %v389 = vld [vmem:[#allocation12] sm:$0x1]
    %v391 = vlaneseq
    %v392 = vshrl.u32 %v391, 7
    %v393 = vsub.s32 0, %v392
    %v394 = vrot.slane %v389, %v393
    %v396 = vsel %vm105, %v377, 0
    %398 = vmatprep.subr.mxu0 0.0
    %399 = vmatpush1.msra.mxu0 %v385
    %400 = vmatprep.subr.mxu0 0.0
    %401 = vmatpush1.msra.mxu0 %v386
    %402 = vmatprep.subr.mxu0 0.0
    %403 = vmatpush1.msra.mxu0 %v387
    %404 = vmatprep.subr.mxu0 0.0
    %405 = vmatpush1.msra.mxu0 %v388
    %406 = vmatprep.subr.mxu0 0.0
    %407 = vmatpush1.msra.mxu0 0.0
    %408 = vmatprep.subr.mxu0 0.0
    %409 = vmatpush1.msra.mxu0 0.0
    %410 = vmatprep.subr.mxu0 0.0
    %411 = vmatpush1.msra.mxu0 0.0
    %412 = vmatprep.subr.mxu0 0.0
    %413 = vmatpush1.msra.mxu0 0.0
    %414 = vmatprep.subr.mxu0 0.0
    %415 = vmatpush1.msra.mxu0 0.0
    %416 = vmatprep.subr.mxu0 0.0
    %417 = vmatpush1.msra.mxu0 0.0
    %418 = vmatprep.subr.mxu0 0.0
    %419 = vmatpush1.msra.mxu0 0.0
    %420 = vmatprep.subr.mxu0 0.0
    %421 = vmatpush1.msra.mxu0 0.0
    %422 = vmatprep.subr.mxu0 0.0
    %423 = vmatpush1.msra.mxu0 0.0
    %424 = vmatprep.subr.mxu0 0.0
    %425 = vmatpush1.msra.mxu0 0.0
    %426 = vmatprep.subr.mxu0 0.0
    %427 = vmatpush1.msra.mxu0 0.0
    %428 = vmatprep.subr.mxu0 0.0
    %429 = vmatpush1.msra.mxu0 0.0
    %430 = vmatprep.subr.mxu0 0.0
    %431 = vmatpush1.msra.mxu0 0.0
    %432 = vmatprep.subr.mxu0 0.0
    %433 = vmatpush1.msra.mxu0 0.0
    %434 = vmatprep.subr.mxu0 0.0
    %435 = vmatpush1.msra.mxu0 0.0
    %436 = vmatprep.subr.mxu0 0.0
    %437 = vmatpush1.msra.mxu0 0.0
    %438 = vmatprep.subr.mxu0 0.0
    %439 = vmatpush1.msra.mxu0 0.0
    %440 = vmatprep.subr.mxu0 0.0
    %441 = vmatpush1.msra.mxu0 0.0
    %442 = vmatprep.subr.mxu0 0.0
    %443 = vmatpush1.msra.mxu0 0.0
    %444 = vmatprep.subr.mxu0 0.0
    %445 = vmatpush1.msra.mxu0 0.0
    %446 = vmatprep.subr.mxu0 0.0
    %447 = vmatpush1.msra.mxu0 0.0
    %448 = vmatprep.subr.mxu0 0.0
    %449 = vmatpush1.msra.mxu0 0.0
    %450 = vmatprep.subr.mxu0 0.0
    %451 = vmatpush1.msra.mxu0 0.0
    %452 = vmatprep.subr.mxu0 0.0
    %453 = vmatpush1.msra.mxu0 0.0
    %454 = vmatprep.subr.mxu0 0.0
    %455 = vmatpush1.msra.mxu0 0.0
    %456 = vmatprep.subr.mxu0 0.0
    %457 = vmatpush1.msra.mxu0 0.0
    %458 = vmatprep.subr.mxu0 0.0
    %459 = vmatpush1.msra.mxu0 0.0
    %460 = vmatprep.subr.mxu0 0.0
    %461 = vmatpush1.msra.mxu0 0.0
    %462 = vmatprep.mubr.f32.mxu0 0.0
    %463 = vmatmul.mubr.f32.gmra.mrb[0].mxu0 %v396
    %v464 = vpop.f32.mrb[0].mxu0
    %v465 = vadd.f32 %v394, %v464
    %v466 = vpop.f32.mrb[0].mxu0
    %467 = vdwg.mxu0
    %468 = vst [vmem:[#allocation13] sm:$0xff] %v465
    %v469 = vld [vmem:[#allocation2] sm:$0xff]
    %v470 = vld [vmem:[#allocation2 + $0x8] sm:$0xff]
    %471 = vst.msk [vmem:[#allocation14] sm:$0xff] %vm105, %v469
    %472 = vst.msk [vmem:[#allocation14 + $0x8] sm:$0xff] %vm105, %v470
    %v473 = vld [vmem:[#allocation3] sm:$0xff]
    %v474 = vld [vmem:[#allocation3 + $0x8] sm:$0xff]
    %475 = vst.msk [vmem:[#allocation16] sm:$0xff] %vm105, %v473
    %476 = vst.msk [vmem:[#allocation16 + $0x8] sm:$0xff] %vm105, %v474
    // Predicated region
    $region58: #{tpu_custom_call.1} parent=1 // pred_check
      _
    $region59: #{tpu_custom_call.1} parent=1 // pred_check_branch
      %478 = sbr.rel (0) target = $region61
    $region60: #{tpu_custom_call.1} parent=1 // pred_region
      %s480 = ssub.s32 128, 128
      %481 = vsyncadd [#allocation6], %s480
      %s483 = sshll.u32 [#allocation13], 4
      %s484 = int_to_ptr.vmem [resolvable:$true] %s483
      %486 = dma.vmem_to_hbm [thread:$0]  %s484, 128, %s9, [#allocation6]
    $region61: #{tpu_custom_call.1} parent=1 // pred_fallthru
      _
    // Predicated region
    $region62: #{tpu_custom_call.1} parent=1 // pred_check
      _
    $region63: #{tpu_custom_call.1} parent=1 // pred_check_branch
      %488 = sbr.rel (0) target = $region65
    $region64: #{tpu_custom_call.1} parent=1 // pred_region
      %s490 = ssub.s32 256, 256
      %491 = vsyncadd [#allocation15], %s490
      %s492 = sshll.u32 [#allocation14], 4
      %s493 = int_to_ptr.vmem [resolvable:$true] %s492
      %498 = dma.vmem_to_hbm [thread:$0]  %s493, 256, %s10, [#allocation15], 128, 128, 8
    $region65: #{tpu_custom_call.1} parent=1 // pred_fallthru
      _
    // Predicated region
    $region66: #{tpu_custom_call.1} parent=1 // pred_check
      _
    $region67: #{tpu_custom_call.1} parent=1 // pred_check_branch
      %500 = sbr.rel (0) target = $region69
    $region68: #{tpu_custom_call.1} parent=1 // pred_region
      %s502 = ssub.s32 256, 256
      %503 = vsyncadd [#allocation15], %s502
      %s504 = sshll.u32 [#allocation16], 4
      %s505 = int_to_ptr.vmem [resolvable:$true] %s504
      %510 = dma.vmem_to_hbm [thread:$0]  %s505, 256, %s11, [#allocation15], 128, 128, 8
    $region69: #{tpu_custom_call.1} parent=1 // pred_fallthru
      _
    // Predicated region
    $region70: #{tpu_custom_call.1} parent=1 // pred_check
      _
    $region71: #{tpu_custom_call.1} parent=1 // pred_check_branch
      %512 = sbr.rel (0) target = $region73
    $region72: #{tpu_custom_call.1} parent=1 // pred_region
      %513 = dma.done [#allocation6], 128
    $region73: #{tpu_custom_call.1} parent=1 // pred_fallthru
      _
    // Predicated region
    $region74: #{tpu_custom_call.1} parent=1 // pred_check
      _
    $region75: #{tpu_custom_call.1} parent=1 // pred_check_branch
      %515 = sbr.rel (0) target = $region77
    $region76: #{tpu_custom_call.1} parent=1 // pred_region
      %516 = dma.done [#allocation15], 256
    $region77: #{tpu_custom_call.1} parent=1 // pred_fallthru
      _
    // Predicated region
    $region78: #{tpu_custom_call.1} parent=1 // pred_check
      _
    $region79: #{tpu_custom_call.1} parent=1 // pred_check_branch
      %518 = sbr.rel (0) target = $region81
    $region80: #{tpu_custom_call.1} parent=1 // pred_region
      %519 = dma.done [#allocation15], 256
    $region81: #{tpu_custom_call.1} parent=1 // pred_fallthru
      _
    %520 = vsyncpa [#allocation5], 1
    %521 = vsyncpa [#allocation8], 1
    %522 = vsyncpa [#allocation11], 1
    %523 = vsyncpa [#allocation6], 1
    %524 = vsyncpa [#allocation15], 1

</llo_original>
